<compile_context>
chip_gen: v7x
topology: tpu7x:2x2x1
jax: 0.10.0
libtpu: 0.0.40
codegen_flags: <defaults>
</compile_context>

<pallas_src>
import jax
import jax.numpy as jnp
from jax.experimental import pallas as pl
from jax.experimental.pallas import tpu as pltpu


def _round_up(x, m):
    return ((x + m - 1) // m) * m


def _lfa_kernel(x_ref, nb_ref,
                wqk_ref, bqk_ref, ssum_ref, srep_ref, wvf_ref, bvf_ref,
                o_ref):
    # x_ref:    [TN, E]    query-node tile (f32)
    # nb_ref:   [TN, K*E]  gathered neighbors, lane-dense (bf16 stream by default)
    # wqk_ref:  [E, K*E]   (Wq^T Wk)/sqrt(E), replicated K times along columns
    # bqk_ref:  [1, K*E]   (bq Wk)/sqrt(E),   replicated K times
    # ssum_ref: [K*E, K]   block-sum selector   (sum each E-chunk -> one score per neighbor)
    # srep_ref: [K, K*E]   block-replicate selector (broadcast each weight over its E-chunk)
    # wvf_ref:  [K*E, OUT] Wv^T Wf^T tiled K times along rows
    # bvf_ref:  [1, OUT]   bv Wf^T + bf
    # o_ref:    [TN, OUT]
    f32 = jnp.float32
    x = x_ref[...].astype(f32)                        # [TN, E]
    # Upcast the streamed neighbor tile once: keeps all VPU elementwise / softmax in f32
    # (v5e has no bf16 VALU) while the HBM stream stays half-width.
    nb = nb_ref[...].astype(f32)                      # [TN, K*E]

    # Replicated, pre-scaled query/key projection: q2_rep[n, k*E+e] = q2[n, e]
    q2_rep = jnp.dot(x, wqk_ref[...],
                     preferred_element_type=f32) + bqk_ref[...]            # [TN, K*E]

    # scores[n, k] = sum_e nb[n,k,e] * q2[n,e]   (scale already folded into q2)
    scores = jnp.dot(nb * q2_rep, ssum_ref[...],
                     preferred_element_type=f32)                           # [TN, K]

    # Softmax over the K neighbors (exact division; approx reciprocal would cost accuracy)
    scores = scores - jnp.max(scores, axis=-1, keepdims=True)
    p = jnp.exp(scores)
    w = p / jnp.sum(p, axis=-1, keepdims=True)                             # [TN, K]

    # ctx-then-project, fused: out = (sum_k w*nb) @ Wv^T Wf^T + (bv Wf^T + bf)
    w_rep = jnp.dot(w, srep_ref[...],
                    preferred_element_type=f32)                            # [TN, K*E]
    out = jnp.dot(w_rep * nb, wvf_ref[...],
                  preferred_element_type=f32) + bvf_ref[...]               # [TN, OUT]
    o_ref[...] = out.astype(o_ref.dtype)


def fuse_lfa_params(params, num_neighbors):
    """Build the algebraically-fused, lane-dense weight constants ONCE per parameter set.

    (Perf-review item: don't rebuild these small constants on every invocation.)
    """
    E = params["wq"].shape[0]
    K = int(num_neighbors)
    OUT = params["wf"].shape[0]
    KE = K * E
    f32 = jnp.float32

    wq, bq = params["wq"].astype(f32), params["bq"].astype(f32)
    wk = params["wk"].astype(f32)
    wv, bv = params["wv"].astype(f32), params["bv"].astype(f32)
    wf, bf = params["wf"].astype(f32), params["bf"].astype(f32)

    scale = 1.0 / (E ** 0.5)
    w_qk = (wq.T @ wk) * scale                      # [E, E]   (scale folded in)
    b_qk = (bq @ wk) * scale                        # [E]
    w_vf = wv.T @ wf.T                              # [E, OUT]
    b_vf = (bv @ wf.T + bf).reshape(1, OUT)         # [1, OUT]

    return {
        "w_qkrep": jnp.tile(w_qk, (1, K)),                                  # [E, K*E]
        "b_qkrep": jnp.tile(b_qk, K).reshape(1, KE),                        # [1, K*E]
        "w_vfrep": jnp.tile(w_vf, (K, 1)),                                  # [K*E, OUT]
        "b_vf": b_vf,                                                       # [1, OUT]
        "s_sum": jnp.kron(jnp.eye(K, dtype=f32), jnp.ones((E, 1), f32)),    # [K*E, K]
        "s_rep": jnp.kron(jnp.eye(K, dtype=f32), jnp.ones((1, E), f32)),    # [K, K*E]
    }


def language_feature_attention(x_in, neighb_in, fused, *, tile_n=1024,
                               neighbor_dtype=jnp.bfloat16, out_dtype=jnp.float32):
    """x_in: [N, E] float; neighb_in: [N, K] int32 row indices into x_in.

    `fused` is the output of fuse_lfa_params(params, K).
    neighbor_dtype=bf16 halves the dominant [N, K*E] HBM stream (accuracy ~1e-2 rel);
    pass jnp.float32 for bit-level parity with the pure-f32 module math.
    """
    N, E = x_in.shape
    K = neighb_in.shape[1]
    KE = fused["w_qkrep"].shape[1]
    assert KE == K * E, "fused params built for a different neighbor count"
    OUT = fused["b_vf"].shape[1]
    f32 = jnp.float32

    # The gather stays in XLA (see TODO at top of file); it is done at `neighbor_dtype`
    # so the materialized [N, K*E] array round-trips HBM at half width by default.
    nb = jnp.take(x_in.astype(neighbor_dtype), neighb_in, axis=0).reshape(N, KE)

    # Tile over N.  16-row alignment keeps bf16 sublane packing happy; the ragged tail
    # is zero-padded (padded rows give a finite uniform softmax and are sliced off).
    ALIGN = 16
    n_min = _round_up(N, ALIGN)
    tn = min(_round_up(int(tile_n), ALIGN), n_min)
    # v7x has two TensorCores sharing the single "parallel" N axis: if everything would
    # land in one tile but the problem is big enough (>=2 tiles of >=512 rows, which
    # still hit ~85% of HBM roofline), split into two balanced tiles.
    if n_min >= 1024 and n_min <= tn:
        tn = _round_up((n_min + 1) // 2, ALIGN)
    n_pad = _round_up(N, tn)

    x_p = jnp.pad(x_in.astype(f32), ((0, n_pad - N), (0, 0)))
    nb_p = jnp.pad(nb, ((0, n_pad - N), (0, 0)))

    # Explicit VMEM budget: double-buffered streams + replicated weight constants +
    # in-kernel f32 temporaries, clamped to [32 MiB, 48 MiB] — raises v5e's 16 MiB
    # default scoped limit for large tiles while staying inside v7x's 64 MiB VMEM.
    stream = 2 * (tn * KE * jnp.dtype(neighbor_dtype).itemsize
                  + tn * E * 4
                  + tn * OUT * jnp.dtype(out_dtype).itemsize)
    consts = 2 * 4 * (E * KE + KE + KE * K + K * KE + KE * OUT + OUT)
    temps = 6 * tn * KE * 4
    vmem_limit = int(min(48 * 2**20, max(32 * 2**20, 2 * (stream + consts + temps))))

    def const2d(a):
        return pl.BlockSpec(a.shape, lambda i: (0, 0))

    out = pl.pallas_call(
        _lfa_kernel,
        out_shape=jax.ShapeDtypeStruct((n_pad, OUT), out_dtype),
        grid_spec=pltpu.PrefetchScalarGridSpec(
            num_scalar_prefetch=0,
            grid=(n_pad // tn,),
            in_specs=[
                pl.BlockSpec((tn, E), lambda i: (i, 0)),    # x tile (f32, small stream)
                pl.BlockSpec((tn, KE), lambda i: (i, 0)),   # neighbor tile (lane-dense, bf16)
                const2d(fused["w_qkrep"]), const2d(fused["b_qkrep"]),
                const2d(fused["s_sum"]), const2d(fused["s_rep"]),
                const2d(fused["w_vfrep"]), const2d(fused["b_vf"]),
            ],
            out_specs=pl.BlockSpec((tn, OUT), lambda i: (i, 0)),
        ),
        compiler_params=pltpu.CompilerParams(
            dimension_semantics=("parallel",),   # shards N-tiles over both v7x TCs
            vmem_limit_bytes=vmem_limit),
    )(x_p, nb_p, fused["w_qkrep"], fused["b_qkrep"], fused["s_sum"],
      fused["s_rep"], fused["w_vfrep"], fused["b_vf"])
    return out[:N]


def _reference(x_in, neighb_in, params):
    """Plain-JAX reference mirroring the PyTorch forward (separate Q/K/V/fc, with bk)."""
    E = x_in.shape[1]
    neighb = x_in[neighb_in]                                       # [N, K, E]
    q = x_in @ params["wq"].T + params["bq"]                       # [N, E]
    k = neighb @ params["wk"].T + params["bk"]                     # [N, K, E]
    v = neighb @ params["wv"].T + params["bv"]                     # [N, K, E]
    scores = jnp.einsum("ne,nke->nk", q, k) / (E ** 0.5)
    w = jax.nn.softmax(scores, axis=-1)
    attn = jnp.einsum("nk,nke->ne", w, v)
    return attn @ params["wf"].T + params["bf"]


if __name__ == "__main__":
    # Small shapes: N nodes=16, embed_size=32, K neighbors per node=8, out_size=128
    N, E, K, OUT = 16, 32, 8, 128

    key = jax.random.PRNGKey(0)
    keys = jax.random.split(key, 10)

    x_in = jax.random.normal(keys[0], (N, E), dtype=jnp.float32)
    neighb_in = jax.random.randint(keys[1], (N, K), 0, N, dtype=jnp.int32)

    # Deterministic parameter init (uniform like nn.Linear's default range).
    def lin_init(kw, kb, out_f, in_f):
        bound = 1.0 / (in_f ** 0.5)
        w = jax.random.uniform(kw, (out_f, in_f), jnp.float32, -bound, bound)
        b = jax.random.uniform(kb, (out_f,), jnp.float32, -bound, bound)
        return w, b

    wq, bq = lin_init(keys[2], keys[3], E, E)
    wk, bk = lin_init(keys[4], keys[5], E, E)
    wv, bv = lin_init(keys[6], keys[7], E, E)
    wf, bf = lin_init(keys[8], keys[9], OUT, E)
    params = dict(wq=wq, bq=bq, wk=wk, bk=bk, wv=wv, bv=bv, wf=wf, bf=bf)

    # Fused weight constants built once per parameter set (cached across calls).
    fused = fuse_lfa_params(params, K)

    ref = _reference(x_in, neighb_in, params)

    # 1) f32 neighbor stream: algebra-only fusion, matches the module to f32 rounding.
    out_f32 = jax.block_until_ready(
        language_feature_attention(x_in, neighb_in, fused, neighbor_dtype=jnp.float32))
    assert out_f32.shape == (N, OUT)
    assert jnp.allclose(out_f32, ref, atol=2e-4, rtol=2e-4), "f32-stream mismatch vs reference"

    # 2) default bf16 neighbor stream: halves dominant HBM traffic; ~1e-2 rel accuracy.
    out = jax.block_until_ready(language_feature_attention(x_in, neighb_in, fused))
    assert out.shape == (N, OUT)
    assert jnp.allclose(out, ref, atol=2e-2, rtol=2e-2), "bf16-stream mismatch vs reference"

    print("KERNEL_OK")
</pallas_src>

<mosaic_0001>
module attributes {stable_mosaic.version = 11 : i64} {
  func.func @_lfa_kernel(%arg0: i32, %arg1: memref<16x32xf32, #tpu.memory_space<vmem>>, %arg2: memref<16x256xf32, #tpu.memory_space<vmem>>, %arg3: memref<32x256xf32, #tpu.memory_space<vmem>>, %arg4: memref<1x256xf32, #tpu.memory_space<vmem>>, %arg5: memref<256x8xf32, #tpu.memory_space<vmem>>, %arg6: memref<8x256xf32, #tpu.memory_space<vmem>>, %arg7: memref<256x128xf32, #tpu.memory_space<vmem>>, %arg8: memref<1x128xf32, #tpu.memory_space<vmem>>, %arg9: memref<16x128xf32, #tpu.memory_space<vmem>>) attributes {dimension_semantics = [#tpu.dimension_semantics<parallel>], iteration_bounds = array<i64: 1>, scalar_prefetch = 0 : i64, scratch_operands = 0 : i64, tpu.core_type = #tpu.core_type<tc>, window_params = [{transform_indices = @transform_0, window_bounds = array<i64: 16, 32>}, {transform_indices = @transform_1, window_bounds = array<i64: 16, 256>}, {pipeline_mode = #tpu.pipeline_mode<synchronous>, transform_indices = @transform_2, window_bounds = array<i64: 32, 256>}, {pipeline_mode = #tpu.pipeline_mode<synchronous>, transform_indices = @transform_3, window_bounds = array<i64: 1, 256>}, {pipeline_mode = #tpu.pipeline_mode<synchronous>, transform_indices = @transform_4, window_bounds = array<i64: 256, 8>}, {pipeline_mode = #tpu.pipeline_mode<synchronous>, transform_indices = @transform_5, window_bounds = array<i64: 8, 256>}, {pipeline_mode = #tpu.pipeline_mode<synchronous>, transform_indices = @transform_6, window_bounds = array<i64: 256, 128>}, {pipeline_mode = #tpu.pipeline_mode<synchronous>, transform_indices = @transform_7, window_bounds = array<i64: 1, 128>}, {transform_indices = @transform_8, window_bounds = array<i64: 16, 128>}]} {
    %c0 = arith.constant 0 : index
    %c0_0 = arith.constant 0 : index
    %0 = vector.load %arg1[%c0, %c0_0] : memref<16x32xf32, #tpu.memory_space<vmem>>, vector<16x32xf32>
    %c0_1 = arith.constant 0 : index
    %c0_2 = arith.constant 0 : index
    %1 = vector.load %arg2[%c0_1, %c0_2] : memref<16x256xf32, #tpu.memory_space<vmem>>, vector<16x256xf32>
    %c0_3 = arith.constant 0 : index
    %c0_4 = arith.constant 0 : index
    %2 = vector.load %arg3[%c0_3, %c0_4] : memref<32x256xf32, #tpu.memory_space<vmem>>, vector<32x256xf32>
    %cst = arith.constant dense<0.000000e+00> : vector<16x256xf32>
    %3 = tpu.matmul %0, %2, %cst {dimension_numbers = #tpu.dot_dimension_numbers<[1], [0], [0], [1], [0, 0, 1, 1], [], []>} : vector<16x32xf32>, vector<32x256xf32>, vector<16x256xf32> -> vector<16x256xf32>
    %c0_5 = arith.constant 0 : index
    %c0_6 = arith.constant 0 : index
    %4 = vector.load %arg4[%c0_5, %c0_6] : memref<1x256xf32, #tpu.memory_space<vmem>>, vector<1x256xf32>
    %5 = vector.broadcast %4 : vector<1x256xf32> to vector<16x256xf32>
    %6 = arith.addf %3, %5 : vector<16x256xf32>
    %7 = arith.mulf %1, %6 : vector<16x256xf32>
    %c0_7 = arith.constant 0 : index
    %c0_8 = arith.constant 0 : index
    %8 = vector.load %arg5[%c0_7, %c0_8] : memref<256x8xf32, #tpu.memory_space<vmem>>, vector<256x8xf32>
    %cst_9 = arith.constant dense<0.000000e+00> : vector<16x8xf32>
    %9 = tpu.matmul %7, %8, %cst_9 {dimension_numbers = #tpu.dot_dimension_numbers<[1], [0], [0], [1], [0, 0, 1, 1], [], []>} : vector<16x256xf32>, vector<256x8xf32>, vector<16x8xf32> -> vector<16x8xf32>
    %cst_10 = arith.constant dense<0xFF800000> : vector<16xf32>
    %10 = vector.multi_reduction <maximumf>, %9, %cst_10 [1] : vector<16x8xf32> to vector<16xf32>
    %11 = vector.shape_cast %10 : vector<16xf32> to vector<16x1xf32>
    %12 = vector.broadcast %11 : vector<16x1xf32> to vector<16x8xf32>
    %13 = arith.subf %9, %12 : vector<16x8xf32>
    %14 = math.exp %13 : vector<16x8xf32>
    %cst_11 = arith.constant dense<0.000000e+00> : vector<16xf32>
    %15 = vector.multi_reduction <add>, %14, %cst_11 [1] : vector<16x8xf32> to vector<16xf32>
    %16 = vector.shape_cast %15 : vector<16xf32> to vector<16x1xf32>
    %17 = vector.broadcast %16 : vector<16x1xf32> to vector<16x8xf32>
    %18 = arith.divf %14, %17 : vector<16x8xf32>
    %c0_12 = arith.constant 0 : index
    %c0_13 = arith.constant 0 : index
    %19 = vector.load %arg6[%c0_12, %c0_13] : memref<8x256xf32, #tpu.memory_space<vmem>>, vector<8x256xf32>
    %cst_14 = arith.constant dense<0.000000e+00> : vector<16x256xf32>
    %20 = tpu.matmul %18, %19, %cst_14 {dimension_numbers = #tpu.dot_dimension_numbers<[1], [0], [0], [1], [0, 0, 1, 1], [], []>} : vector<16x8xf32>, vector<8x256xf32>, vector<16x256xf32> -> vector<16x256xf32>
    %21 = arith.mulf %20, %1 : vector<16x256xf32>
    %c0_15 = arith.constant 0 : index
    %c0_16 = arith.constant 0 : index
    %22 = vector.load %arg7[%c0_15, %c0_16] : memref<256x128xf32, #tpu.memory_space<vmem>>, vector<256x128xf32>
    %cst_17 = arith.constant dense<0.000000e+00> : vector<16x128xf32>
    %23 = tpu.matmul %21, %22, %cst_17 {dimension_numbers = #tpu.dot_dimension_numbers<[1], [0], [0], [1], [0, 0, 1, 1], [], []>} : vector<16x256xf32>, vector<256x128xf32>, vector<16x128xf32> -> vector<16x128xf32>
    %c0_18 = arith.constant 0 : index
    %c0_19 = arith.constant 0 : index
    %24 = vector.load %arg8[%c0_18, %c0_19] : memref<1x128xf32, #tpu.memory_space<vmem>>, vector<1x128xf32>
    %25 = vector.broadcast %24 : vector<1x128xf32> to vector<16x128xf32>
    %26 = arith.addf %23, %25 : vector<16x128xf32>
    %c0_20 = arith.constant 0 : index
    %c0_21 = arith.constant 0 : index
    %27 = vector.load %arg9[%c0_20, %c0_21] : memref<16x128xf32, #tpu.memory_space<vmem>>, vector<16x128xf32>
    tpu.vector_store %arg9[%c0_20, %c0_21], %26 {strides = array<i32>} : memref<16x128xf32, #tpu.memory_space<vmem>>, vector<16x128xf32>,
    return
  }
  func.func @transform_0(%arg0: i32) -> (i32, i32) {
    %c0_i32 = arith.constant 0 : i32
    %c0_i32_0 = arith.constant 0 : i32
    return %arg0, %c0_i32 : i32, i32
  }
  func.func @transform_1(%arg0: i32) -> (i32, i32) {
    %c0_i32 = arith.constant 0 : i32
    %c0_i32_0 = arith.constant 0 : i32
    return %arg0, %c0_i32 : i32, i32
  }
  func.func @transform_2(%arg0: i32) -> (i32, i32) {
    %c0_i32 = arith.constant 0 : i32
    %c0_i32_0 = arith.constant 0 : i32
    %c0_i32_1 = arith.constant 0 : i32
    return %c0_i32, %c0_i32_0 : i32, i32
  }
  func.func @transform_3(%arg0: i32) -> (i32, i32) {
    %c0_i32 = arith.constant 0 : i32
    %c0_i32_0 = arith.constant 0 : i32
    %c0_i32_1 = arith.constant 0 : i32
    return %c0_i32, %c0_i32_0 : i32, i32
  }
  func.func @transform_4(%arg0: i32) -> (i32, i32) {
    %c0_i32 = arith.constant 0 : i32
    %c0_i32_0 = arith.constant 0 : i32
    %c0_i32_1 = arith.constant 0 : i32
    return %c0_i32, %c0_i32_0 : i32, i32
  }
  func.func @transform_5(%arg0: i32) -> (i32, i32) {
    %c0_i32 = arith.constant 0 : i32
    %c0_i32_0 = arith.constant 0 : i32
    %c0_i32_1 = arith.constant 0 : i32
    return %c0_i32, %c0_i32_0 : i32, i32
  }
  func.func @transform_6(%arg0: i32) -> (i32, i32) {
    %c0_i32 = arith.constant 0 : i32
    %c0_i32_0 = arith.constant 0 : i32
    %c0_i32_1 = arith.constant 0 : i32
    return %c0_i32, %c0_i32_0 : i32, i32
  }
  func.func @transform_7(%arg0: i32) -> (i32, i32) {
    %c0_i32 = arith.constant 0 : i32
    %c0_i32_0 = arith.constant 0 : i32
    %c0_i32_1 = arith.constant 0 : i32
    return %c0_i32, %c0_i32_0 : i32, i32
  }
  func.func @transform_8(%arg0: i32) -> (i32, i32) {
    %c0_i32 = arith.constant 0 : i32
    %c0_i32_0 = arith.constant 0 : i32
    return %arg0, %c0_i32 : i32, i32
  }
}

</mosaic_0001>

<llo_original>
// kernel: tpu_custom_call.1
$region0: #{tpu_custom_call.1}
  #allocation0 [shape = 'u32[]', space=smem, size = 0x4, offset = 0x4, fixed_abs, tag = 'smem constant byte address 0x4 - core index']
  #allocation1 [shape = 'u32[144,128]{1,0:T(1,128)}', space=vmem, size = 0x12000, scoped, tag = 'internal scratch']
  %s0 = inlined_call_operand.hbm [shape: f32[16,32], index: 0, kind: input, shape index: {}]
  %s1 = inlined_call_operand.vmem [shape: f32[16,256], index: 1, kind: input, shape index: {}]
  %s2 = inlined_call_operand.hbm [shape: f32[32,256], index: 2, kind: input, shape index: {}]
  %s3 = inlined_call_operand.vmem [shape: f32[1,256], index: 3, kind: input, shape index: {}]
  %s4 = inlined_call_operand.vmem [shape: f32[256,8], index: 4, kind: input, shape index: {}]
  %s5 = inlined_call_operand.hbm [shape: f32[8,256], index: 5, kind: input, shape index: {}]
  %s6 = inlined_call_operand.vmem [shape: f32[256,128], index: 6, kind: input, shape index: {}]
  %s7 = inlined_call_operand.vmem [shape: f32[1,128], index: 7, kind: input, shape index: {}]
  %s8 = inlined_call_operand.hbm [shape: f32[16,128], index: 8, kind: output, shape index: {}]
  %s9 = sld [smem:[#allocation0]]
  $region54: #{tpu_custom_call.1} parent=0
    _
  %s11 = ssub.s32 1, %s9
  %s12 = scalar_select 0, %s11, %s9
  $region1: #{tpu_custom_call.1} parent=0
    #allocation2 [shape = 'u8[8192]{0}', space=vmem, size = 0x2000, scoped, tag = 'input window, operand 0, single buffered']
    #allocation3 [shape = 's32[1]{0}', space=sflag, size = 0x4, scoped, tag = 'scoped memory for tpu_custom_call.1']
    #allocation4 [shape = 's32[1]{0}', space=sflag, size = 0x4, scoped, tag = 'scoped memory for tpu_custom_call.1']
    #allocation5 [shape = 'u8[32768]{0}', space=vmem, size = 0x8000, scoped, tag = 'input window, operand 2, single buffered']
    #allocation6 [shape = 's32[1]{0}', space=sflag, size = 0x4, scoped, tag = 'scoped memory for tpu_custom_call.1']
    #allocation7 [shape = 'u8[8192]{0}', space=vmem, size = 0x2000, scoped, tag = 'input window, operand 5, single buffered']
    #allocation8 [shape = 'u8[8192]{0}', space=vmem, size = 0x2000, scoped, tag = 'output window, operand 0, single buffered']
    %13 = vsyncpa [#allocation3], 0
    %14 = vsyncpa [#allocation6], 0
    %15 = vsyncpa [#allocation4], 0
    // Predicated region
    $region2: #{tpu_custom_call.1} parent=1 // pred_check
      _
    $region3: #{tpu_custom_call.1} parent=1 // pred_check_branch
      %17 = sbr.rel (0) target = $region5
    $region4: #{tpu_custom_call.1} parent=1 // pred_region
      %s19 = ssub.s32 256, 256
      %20 = vsyncadd [#allocation3], %s19
      %s21 = sshll.u32 [#allocation2], 4
      %s22 = int_to_ptr.vmem [resolvable:$true] %s21
      %27 = dma.hbm_to_vmem [thread:$0]  %s0, 256, %s22, [#allocation3], 128, 128, 8
    $region5: #{tpu_custom_call.1} parent=1 // pred_fallthru
      _
    // Predicated region
    $region6: #{tpu_custom_call.1} parent=1 // pred_check
      _
    $region7: #{tpu_custom_call.1} parent=1 // pred_check_branch
      %29 = sbr.rel (0) target = $region9
    $region8: #{tpu_custom_call.1} parent=1 // pred_region
      _
    $region9: #{tpu_custom_call.1} parent=1 // pred_fallthru
      _
    // Predicated region
    $region10: #{tpu_custom_call.1} parent=1 // pred_check
      _
    $region11: #{tpu_custom_call.1} parent=1 // pred_check_branch
      %31 = sbr.rel (0) target = $region13
    $region12: #{tpu_custom_call.1} parent=1 // pred_region
      %s33 = ssub.s32 1024, 1024
      %34 = vsyncadd [#allocation6], %s33
      %s35 = sshll.u32 [#allocation5], 4
      %s36 = int_to_ptr.vmem [resolvable:$true] %s35
      %41 = dma.hbm_to_vmem [thread:$0]  %s2, 1024, %s36, [#allocation6], 256, 256, 16
    $region13: #{tpu_custom_call.1} parent=1 // pred_fallthru
      _
    // Predicated region
    $region14: #{tpu_custom_call.1} parent=1 // pred_check
      _
    $region15: #{tpu_custom_call.1} parent=1 // pred_check_branch
      %43 = sbr.rel (0) target = $region17
    $region16: #{tpu_custom_call.1} parent=1 // pred_region
      _
    $region17: #{tpu_custom_call.1} parent=1 // pred_fallthru
      _
    // Predicated region
    $region18: #{tpu_custom_call.1} parent=1 // pred_check
      _
    $region19: #{tpu_custom_call.1} parent=1 // pred_check_branch
      %45 = sbr.rel (0) target = $region21
    $region20: #{tpu_custom_call.1} parent=1 // pred_region
      _
    $region21: #{tpu_custom_call.1} parent=1 // pred_fallthru
      _
    // Predicated region
    $region22: #{tpu_custom_call.1} parent=1 // pred_check
      _
    $region23: #{tpu_custom_call.1} parent=1 // pred_check_branch
      %47 = sbr.rel (0) target = $region25
    $region24: #{tpu_custom_call.1} parent=1 // pred_region
      %s49 = ssub.s32 256, 256
      %50 = vsyncadd [#allocation6], %s49
      %s52 = sshll.u32 [#allocation7], 4
      %s53 = int_to_ptr.vmem [resolvable:$true] %s52
      %55 = dma.hbm_to_vmem [thread:$0]  %s5, 256, %s53, [#allocation6]
    $region25: #{tpu_custom_call.1} parent=1 // pred_fallthru
      _
    // Predicated region
    $region26: #{tpu_custom_call.1} parent=1 // pred_check
      _
    $region27: #{tpu_custom_call.1} parent=1 // pred_check_branch
      %57 = sbr.rel (0) target = $region29
    $region28: #{tpu_custom_call.1} parent=1 // pred_region
      _
    $region29: #{tpu_custom_call.1} parent=1 // pred_fallthru
      _
    // Predicated region
    $region30: #{tpu_custom_call.1} parent=1 // pred_check
      _
    $region31: #{tpu_custom_call.1} parent=1 // pred_check_branch
      %59 = sbr.rel (0) target = $region33
    $region32: #{tpu_custom_call.1} parent=1 // pred_region
      _
    $region33: #{tpu_custom_call.1} parent=1 // pred_fallthru
      _
    // Predicated region
    $region34: #{tpu_custom_call.1} parent=1 // pred_check
      _
    $region35: #{tpu_custom_call.1} parent=1 // pred_check_branch
      %61 = sbr.rel (0) target = $region37
    $region36: #{tpu_custom_call.1} parent=1 // pred_region
      %62 = dma.done [#allocation3], 256
    $region37: #{tpu_custom_call.1} parent=1 // pred_fallthru
      _
    // Predicated region
    $region38: #{tpu_custom_call.1} parent=1 // pred_check
      _
    $region39: #{tpu_custom_call.1} parent=1 // pred_check_branch
      %64 = sbr.rel (0) target = $region41
    $region40: #{tpu_custom_call.1} parent=1 // pred_region
      %65 = dma.done [#allocation6], 1024
    $region41: #{tpu_custom_call.1} parent=1 // pred_fallthru
      _
    // Predicated region
    $region42: #{tpu_custom_call.1} parent=1 // pred_check
      _
    $region43: #{tpu_custom_call.1} parent=1 // pred_check_branch
      %67 = sbr.rel (0) target = $region45
    $region44: #{tpu_custom_call.1} parent=1 // pred_region
      %68 = dma.done [#allocation6], 256
    $region45: #{tpu_custom_call.1} parent=1 // pred_fallthru
      _
    %v69 = vld [vmem:[#allocation2] sm:$0xff]
    %v70 = vld [vmem:[#allocation2 + $0x8] sm:$0xff]
    %v71 = vld [vmem:[%s1] sm:$0xff]
    %v72 = vld [vmem:[%s1 + $0x8] sm:$0xff]
    %v73 = vld [vmem:[%s1 + $0x10] sm:$0xff]
    %v74 = vld [vmem:[%s1 + $0x18] sm:$0xff]
    %v75 = vld [vmem:[#allocation5] sm:$0xff]
    %v76 = vld [vmem:[#allocation5 + $0x8] sm:$0xff]
    %v77 = vld [vmem:[#allocation5 + $0x10] sm:$0xff]
    %v78 = vld [vmem:[#allocation5 + $0x18] sm:$0xff]
    %v79 = vld [vmem:[#allocation5 + $0x20] sm:$0xff]
    %v80 = vld [vmem:[#allocation5 + $0x28] sm:$0xff]
    %v81 = vld [vmem:[#allocation5 + $0x30] sm:$0xff]
    %v82 = vld [vmem:[#allocation5 + $0x38] sm:$0xff]
    %v83 = vld [vmem:[%s3] sm:$0x3]
    %v85 = vlaneseq
    %v86 = vshrl.u32 %v85, 7
    %v87 = vsub.s32 0, %v86
    %v88 = vrot.slane %v83, %v87
    %v89 = vlaneseq
    %v90 = vshrl.u32 %v89, 7
    %v91 = vsub.s32 1, %v90
    %v92 = vrot.slane %v83, %v91
    %vm95 = vcmask 261120
    %v97 = vsel %vm95, %v69, 0
    %v100 = vsel %vm95, %v70, 0
    %102 = vmatprep.subr.mxu0 %v76
    %103 = vmatpush1.msra.mxu0 %v75
    %104 = vmatprep.subr.mxu0 %v78
    %105 = vmatpush1.msra.mxu0 %v77
    %106 = vmatprep.subr.mxu0 %v80
    %107 = vmatpush1.msra.mxu0 %v79
    %108 = vmatprep.subr.mxu0 %v82
    %109 = vmatpush1.msra.mxu0 %v81
    %110 = vmatprep.subr.mxu0 0.0
    %111 = vmatpush1.msra.mxu0 0.0
    %112 = vmatprep.subr.mxu0 0.0
    %113 = vmatpush1.msra.mxu0 0.0
    %114 = vmatprep.subr.mxu0 0.0
    %115 = vmatpush1.msra.mxu0 0.0
    %116 = vmatprep.subr.mxu0 0.0
    %117 = vmatpush1.msra.mxu0 0.0
    %118 = vmatprep.subr.mxu0 0.0
    %119 = vmatpush1.msra.mxu0 0.0
    %120 = vmatprep.subr.mxu0 0.0
    %121 = vmatpush1.msra.mxu0 0.0
    %122 = vmatprep.subr.mxu0 0.0
    %123 = vmatpush1.msra.mxu0 0.0
    %124 = vmatprep.subr.mxu0 0.0
    %125 = vmatpush1.msra.mxu0 0.0
    %126 = vmatprep.subr.mxu0 0.0
    %127 = vmatpush1.msra.mxu0 0.0
    %128 = vmatprep.subr.mxu0 0.0
    %129 = vmatpush1.msra.mxu0 0.0
    %130 = vmatprep.subr.mxu0 0.0
    %131 = vmatpush1.msra.mxu0 0.0
    %132 = vmatprep.subr.mxu0 0.0
    %133 = vmatpush1.msra.mxu0 0.0
    %134 = vmatprep.subr.mxu0 0.0
    %135 = vmatpush1.msra.mxu0 0.0
    %136 = vmatprep.subr.mxu0 0.0
    %137 = vmatpush1.msra.mxu0 0.0
    %138 = vmatprep.subr.mxu0 0.0
    %139 = vmatpush1.msra.mxu0 0.0
    %140 = vmatprep.subr.mxu0 0.0
    %141 = vmatpush1.msra.mxu0 0.0
    %142 = vmatprep.subr.mxu0 0.0
    %143 = vmatpush1.msra.mxu0 0.0
    %144 = vmatprep.subr.mxu0 0.0
    %145 = vmatpush1.msra.mxu0 0.0
    %146 = vmatprep.subr.mxu0 0.0
    %147 = vmatpush1.msra.mxu0 0.0
    %148 = vmatprep.subr.mxu0 0.0
    %149 = vmatpush1.msra.mxu0 0.0
    %150 = vmatprep.subr.mxu0 0.0
    %151 = vmatpush1.msra.mxu0 0.0
    %152 = vmatprep.subr.mxu0 0.0
    %153 = vmatpush1.msra.mxu0 0.0
    %154 = vmatprep.subr.mxu0 0.0
    %155 = vmatpush1.msra.mxu0 0.0
    %156 = vmatprep.subr.mxu0 0.0
    %157 = vmatpush1.msra.mxu0 0.0
    %158 = vmatprep.subr.mxu0 0.0
    %159 = vmatpush1.msra.mxu0 0.0
    %160 = vmatprep.subr.mxu0 0.0
    %161 = vmatpush1.msra.mxu0 0.0
    %162 = vmatprep.subr.mxu0 0.0
    %163 = vmatpush1.msra.mxu0 0.0
    %164 = vmatprep.subr.mxu0 0.0
    %165 = vmatpush1.msra.mxu0 0.0
    %166 = vmatprep.mubr.f32.mxu0 0.0
    %167 = vmatmul.mubr.f32.gmra.mrb[0].mxu0 %v97
    %v168 = vpop.f32.mrb[0].mxu0
    %v169 = vadd.f32 %v88, %v168
    %v170 = vpop.f32.mrb[0].mxu0
    %v171 = vadd.f32 %v92, %v170
    %172 = vmatprep.mubr.f32.mxu0 0.0
    %173 = vmatmul.mubr.f32.gmra.mrb[0].mxu0 %v100
    %v174 = vpop.f32.mrb[0].mxu0
    %v175 = vadd.f32 %v88, %v174
    %v176 = vpop.f32.mrb[0].mxu0
    %v177 = vadd.f32 %v92, %v176
    %178 = vdwg.mxu0
    %v179 = vmul.f32 %v71, %v169
    %v180 = vmul.f32 %v72, %v171
    %v181 = vmul.f32 %v73, %v175
    %v182 = vmul.f32 %v74, %v177
    %v183 = vld [vmem:[%s4] sm:$0xff]
    %v184 = vld [vmem:[%s4 + $0x8] sm:$0xff]
    %v185 = vld [vmem:[%s4 + $0x10] sm:$0xff]
    %v186 = vld [vmem:[%s4 + $0x18] sm:$0xff]
    %v187 = vld [vmem:[%s4 + $0x20] sm:$0xff]
    %v188 = vld [vmem:[%s4 + $0x28] sm:$0xff]
    %v189 = vld [vmem:[%s4 + $0x30] sm:$0xff]
    %v190 = vld [vmem:[%s4 + $0x38] sm:$0xff]
    %v191 = vld [vmem:[%s4 + $0x40] sm:$0xff]
    %v192 = vld [vmem:[%s4 + $0x48] sm:$0xff]
    %v193 = vld [vmem:[%s4 + $0x50] sm:$0xff]
    %v194 = vld [vmem:[%s4 + $0x58] sm:$0xff]
    %v195 = vld [vmem:[%s4 + $0x60] sm:$0xff]
    %v196 = vld [vmem:[%s4 + $0x68] sm:$0xff]
    %v197 = vld [vmem:[%s4 + $0x70] sm:$0xff]
    %v198 = vld [vmem:[%s4 + $0x78] sm:$0xff]
    %v199 = vld [vmem:[%s4 + $0x80] sm:$0xff]
    %v200 = vld [vmem:[%s4 + $0x88] sm:$0xff]
    %v201 = vld [vmem:[%s4 + $0x90] sm:$0xff]
    %v202 = vld [vmem:[%s4 + $0x98] sm:$0xff]
    %v203 = vld [vmem:[%s4 + $0xa0] sm:$0xff]
    %v204 = vld [vmem:[%s4 + $0xa8] sm:$0xff]
    %v205 = vld [vmem:[%s4 + $0xb0] sm:$0xff]
    %v206 = vld [vmem:[%s4 + $0xb8] sm:$0xff]
    %v207 = vld [vmem:[%s4 + $0xc0] sm:$0xff]
    %v208 = vld [vmem:[%s4 + $0xc8] sm:$0xff]
    %v209 = vld [vmem:[%s4 + $0xd0] sm:$0xff]
    %v210 = vld [vmem:[%s4 + $0xd8] sm:$0xff]
    %v211 = vld [vmem:[%s4 + $0xe0] sm:$0xff]
    %v212 = vld [vmem:[%s4 + $0xe8] sm:$0xff]
    %v213 = vld [vmem:[%s4 + $0xf0] sm:$0xff]
    %v214 = vld [vmem:[%s4 + $0xf8] sm:$0xff]
    %215 = vmatprep.subr.mxu0 0.0
    %216 = vmatpush1.msra.mxu0 %v183
    %217 = vmatprep.subr.mxu0 0.0
    %218 = vmatpush1.msra.mxu0 %v184
    %219 = vmatprep.subr.mxu0 0.0
    %220 = vmatpush1.msra.mxu0 %v185
    %221 = vmatprep.subr.mxu0 0.0
    %222 = vmatpush1.msra.mxu0 %v186
    %223 = vmatprep.subr.mxu0 0.0
    %224 = vmatpush1.msra.mxu0 %v187
    %225 = vmatprep.subr.mxu0 0.0
    %226 = vmatpush1.msra.mxu0 %v188
    %227 = vmatprep.subr.mxu0 0.0
    %228 = vmatpush1.msra.mxu0 %v189
    %229 = vmatprep.subr.mxu0 0.0
    %230 = vmatpush1.msra.mxu0 %v190
    %231 = vmatprep.subr.mxu0 0.0
    %232 = vmatpush1.msra.mxu0 %v191
    %233 = vmatprep.subr.mxu0 0.0
    %234 = vmatpush1.msra.mxu0 %v192
    %235 = vmatprep.subr.mxu0 0.0
    %236 = vmatpush1.msra.mxu0 %v193
    %237 = vmatprep.subr.mxu0 0.0
    %238 = vmatpush1.msra.mxu0 %v194
    %239 = vmatprep.subr.mxu0 0.0
    %240 = vmatpush1.msra.mxu0 %v195
    %241 = vmatprep.subr.mxu0 0.0
    %242 = vmatpush1.msra.mxu0 %v196
    %243 = vmatprep.subr.mxu0 0.0
    %244 = vmatpush1.msra.mxu0 %v197
    %245 = vmatprep.subr.mxu0 0.0
    %246 = vmatpush1.msra.mxu0 %v198
    %247 = vmatprep.subr.mxu0 0.0
    %248 = vmatpush1.msra.mxu0 %v199
    %249 = vmatprep.subr.mxu0 0.0
    %250 = vmatpush1.msra.mxu0 %v200
    %251 = vmatprep.subr.mxu0 0.0
    %252 = vmatpush1.msra.mxu0 %v201
    %253 = vmatprep.subr.mxu0 0.0
    %254 = vmatpush1.msra.mxu0 %v202
    %255 = vmatprep.subr.mxu0 0.0
    %256 = vmatpush1.msra.mxu0 %v203
    %257 = vmatprep.subr.mxu0 0.0
    %258 = vmatpush1.msra.mxu0 %v204
    %259 = vmatprep.subr.mxu0 0.0
    %260 = vmatpush1.msra.mxu0 %v205
    %261 = vmatprep.subr.mxu0 0.0
    %262 = vmatpush1.msra.mxu0 %v206
    %263 = vmatprep.subr.mxu0 0.0
    %264 = vmatpush1.msra.mxu0 %v207
    %265 = vmatprep.subr.mxu0 0.0
    %266 = vmatpush1.msra.mxu0 %v208
    %267 = vmatprep.subr.mxu0 0.0
    %268 = vmatpush1.msra.mxu0 %v209
    %269 = vmatprep.subr.mxu0 0.0
    %270 = vmatpush1.msra.mxu0 %v210
    %271 = vmatprep.subr.mxu0 0.0
    %272 = vmatpush1.msra.mxu0 %v211
    %273 = vmatprep.subr.mxu0 0.0
    %274 = vmatpush1.msra.mxu0 %v212
    %275 = vmatprep.subr.mxu0 0.0
    %276 = vmatpush1.msra.mxu0 %v213
    %277 = vmatprep.subr.mxu0 0.0
    %278 = vmatpush1.msra.mxu0 %v214
    %279 = vmatprep.mubr.f32.mxu0 %v180
    %280 = vmatmul.mubr.f32.gmra.mrb[0].mxu0 %v179
    %v281 = vpop.f32.mrb[0].mxu0
    %v282 = vadd.f32 0.0, %v281
    %v283 = vpop.f32.mrb[0].mxu0
    %284 = vmatprep.mubr.f32.mxu0 %v182
    %285 = vmatmul.mubr.f32.gmra.mrb[0].mxu0 %v181
    %v286 = vpop.f32.mrb[0].mxu0
    %v287 = vadd.f32 0.0, %v286
    %v288 = vpop.f32.mrb[0].mxu0
    %289 = vdwg.mxu0
    %vm290 = vcmask 64512
    %v291 = vsel %vm290, %v282, -inf
    %292 = vmax.xlane.f32.xlu0 %v291
    %v293 = vpop.xlane.xlu0 %292
    %v294 = vsel %vm290, %v287, -inf
    %295 = vmax.xlane.f32.xlu0 %v294
    %v296 = vpop.xlane.xlu0 %295
    %v297 = vsub.f32 %v282, %v293
    %v298 = vsub.f32 %v287, %v296
    %v299 = vmul.f32 %v297, 1.442695
    %v300 = vpow.pop %v299
    %v301 = vmul.f32 %v298, 1.442695
    %v302 = vpow.pop %v301
    %v303 = vsel %vm290, %v300, 0.0
    %304 = vadd.xlane.f32.xlu0 %v303
    %v305 = vpop.xlane.xlu0 %304
    %v306 = vsel %vm290, %v302, 0.0
    %307 = vadd.xlane.f32.xlu0 %v306
    %v308 = vpop.xlane.xlu0 %307
    %v309 = vrcp.pop %v305
    %v310 = vmul.f32 %v300, %v309
    %v311 = vrcp.pop %v308
    %v312 = vmul.f32 %v302, %v311
    %v313 = vld [vmem:[#allocation7] sm:$0xff]
    %v314 = vld [vmem:[#allocation7 + $0x8] sm:$0xff]
    %v316 = vsel %vm290, %v310, 0
    %v319 = vsel %vm290, %v312, 0
    %321 = vmatprep.subr.mxu0 %v314
    %322 = vmatpush1.msra.mxu0 %v313
    %323 = vmatprep.subr.mxu0 0.0
    %324 = vmatpush1.msra.mxu0 0.0
    %325 = vmatprep.subr.mxu0 0.0
    %326 = vmatpush1.msra.mxu0 0.0
    %327 = vmatprep.subr.mxu0 0.0
    %328 = vmatpush1.msra.mxu0 0.0
    %329 = vmatprep.subr.mxu0 0.0
    %330 = vmatpush1.msra.mxu0 0.0
    %331 = vmatprep.subr.mxu0 0.0
    %332 = vmatpush1.msra.mxu0 0.0
    %333 = vmatprep.subr.mxu0 0.0
    %334 = vmatpush1.msra.mxu0 0.0
    %335 = vmatprep.subr.mxu0 0.0
    %336 = vmatpush1.msra.mxu0 0.0
    %337 = vmatprep.subr.mxu0 0.0
    %338 = vmatpush1.msra.mxu0 0.0
    %339 = vmatprep.subr.mxu0 0.0
    %340 = vmatpush1.msra.mxu0 0.0
    %341 = vmatprep.subr.mxu0 0.0
    %342 = vmatpush1.msra.mxu0 0.0
    %343 = vmatprep.subr.mxu0 0.0
    %344 = vmatpush1.msra.mxu0 0.0
    %345 = vmatprep.subr.mxu0 0.0
    %346 = vmatpush1.msra.mxu0 0.0
    %347 = vmatprep.subr.mxu0 0.0
    %348 = vmatpush1.msra.mxu0 0.0
    %349 = vmatprep.subr.mxu0 0.0
    %350 = vmatpush1.msra.mxu0 0.0
    %351 = vmatprep.subr.mxu0 0.0
    %352 = vmatpush1.msra.mxu0 0.0
    %353 = vmatprep.subr.mxu0 0.0
    %354 = vmatpush1.msra.mxu0 0.0
    %355 = vmatprep.subr.mxu0 0.0
    %356 = vmatpush1.msra.mxu0 0.0
    %357 = vmatprep.subr.mxu0 0.0
    %358 = vmatpush1.msra.mxu0 0.0
    %359 = vmatprep.subr.mxu0 0.0
    %360 = vmatpush1.msra.mxu0 0.0
    %361 = vmatprep.subr.mxu0 0.0
    %362 = vmatpush1.msra.mxu0 0.0
    %363 = vmatprep.subr.mxu0 0.0
    %364 = vmatpush1.msra.mxu0 0.0
    %365 = vmatprep.subr.mxu0 0.0
    %366 = vmatpush1.msra.mxu0 0.0
    %367 = vmatprep.subr.mxu0 0.0
    %368 = vmatpush1.msra.mxu0 0.0
    %369 = vmatprep.subr.mxu0 0.0
    %370 = vmatpush1.msra.mxu0 0.0
    %371 = vmatprep.subr.mxu0 0.0
    %372 = vmatpush1.msra.mxu0 0.0
    %373 = vmatprep.subr.mxu0 0.0
    %374 = vmatpush1.msra.mxu0 0.0
    %375 = vmatprep.subr.mxu0 0.0
    %376 = vmatpush1.msra.mxu0 0.0
    %377 = vmatprep.subr.mxu0 0.0
    %378 = vmatpush1.msra.mxu0 0.0
    %379 = vmatprep.subr.mxu0 0.0
    %380 = vmatpush1.msra.mxu0 0.0
    %381 = vmatprep.subr.mxu0 0.0
    %382 = vmatpush1.msra.mxu0 0.0
    %383 = vmatprep.subr.mxu0 0.0
    %384 = vmatpush1.msra.mxu0 0.0
    %385 = vmatprep.mubr.f32.mxu0 0.0
    %386 = vmatmul.mubr.f32.gmra.mrb[0].mxu0 %v316
    %v387 = vpop.f32.mrb[0].mxu0
    %v388 = vadd.f32 0.0, %v387
    %v389 = vpop.f32.mrb[0].mxu0
    %v390 = vadd.f32 0.0, %v389
    %391 = vmatprep.mubr.f32.mxu0 0.0
    %392 = vmatmul.mubr.f32.gmra.mrb[0].mxu0 %v319
    %v393 = vpop.f32.mrb[0].mxu0
    %v394 = vadd.f32 0.0, %v393
    %v395 = vpop.f32.mrb[0].mxu0
    %v396 = vadd.f32 0.0, %v395
    %397 = vdwg.mxu0
    %v398 = vmul.f32 %v388, %v71
    %v399 = vmul.f32 %v390, %v72
    %v400 = vmul.f32 %v394, %v73
    %v401 = vmul.f32 %v396, %v74
    %v402 = vld [vmem:[%s6] sm:$0xff]
    %v403 = vld [vmem:[%s6 + $0x8] sm:$0xff]
    %v404 = vld [vmem:[%s6 + $0x10] sm:$0xff]
    %v405 = vld [vmem:[%s6 + $0x18] sm:$0xff]
    %v406 = vld [vmem:[%s6 + $0x20] sm:$0xff]
    %v407 = vld [vmem:[%s6 + $0x28] sm:$0xff]
    %v408 = vld [vmem:[%s6 + $0x30] sm:$0xff]
    %v409 = vld [vmem:[%s6 + $0x38] sm:$0xff]
    %v410 = vld [vmem:[%s6 + $0x40] sm:$0xff]
    %v411 = vld [vmem:[%s6 + $0x48] sm:$0xff]
    %v412 = vld [vmem:[%s6 + $0x50] sm:$0xff]
    %v413 = vld [vmem:[%s6 + $0x58] sm:$0xff]
    %v414 = vld [vmem:[%s6 + $0x60] sm:$0xff]
    %v415 = vld [vmem:[%s6 + $0x68] sm:$0xff]
    %v416 = vld [vmem:[%s6 + $0x70] sm:$0xff]
    %v417 = vld [vmem:[%s6 + $0x78] sm:$0xff]
    %v418 = vld [vmem:[%s6 + $0x80] sm:$0xff]
    %v419 = vld [vmem:[%s6 + $0x88] sm:$0xff]
    %v420 = vld [vmem:[%s6 + $0x90] sm:$0xff]
    %v421 = vld [vmem:[%s6 + $0x98] sm:$0xff]
    %v422 = vld [vmem:[%s6 + $0xa0] sm:$0xff]
    %v423 = vld [vmem:[%s6 + $0xa8] sm:$0xff]
    %v424 = vld [vmem:[%s6 + $0xb0] sm:$0xff]
    %v425 = vld [vmem:[%s6 + $0xb8] sm:$0xff]
    %v426 = vld [vmem:[%s6 + $0xc0] sm:$0xff]
    %v427 = vld [vmem:[%s6 + $0xc8] sm:$0xff]
    %v428 = vld [vmem:[%s6 + $0xd0] sm:$0xff]
    %v429 = vld [vmem:[%s6 + $0xd8] sm:$0xff]
    %v430 = vld [vmem:[%s6 + $0xe0] sm:$0xff]
    %v431 = vld [vmem:[%s6 + $0xe8] sm:$0xff]
    %v432 = vld [vmem:[%s6 + $0xf0] sm:$0xff]
    %v433 = vld [vmem:[%s6 + $0xf8] sm:$0xff]
    %v434 = vld [vmem:[%s7] sm:$0x1]
    %v436 = vlaneseq
    %v437 = vshrl.u32 %v436, 7
    %v438 = vsub.s32 0, %v437
    %v439 = vrot.slane %v434, %v438
    %441 = vmatprep.subr.mxu0 0.0
    %442 = vmatpush1.msra.mxu0 %v402
    %443 = vmatprep.subr.mxu0 0.0
    %444 = vmatpush1.msra.mxu0 %v403
    %445 = vmatprep.subr.mxu0 0.0
    %446 = vmatpush1.msra.mxu0 %v404
    %447 = vmatprep.subr.mxu0 0.0
    %448 = vmatpush1.msra.mxu0 %v405
    %449 = vmatprep.subr.mxu0 0.0
    %450 = vmatpush1.msra.mxu0 %v406
    %451 = vmatprep.subr.mxu0 0.0
    %452 = vmatpush1.msra.mxu0 %v407
    %453 = vmatprep.subr.mxu0 0.0
    %454 = vmatpush1.msra.mxu0 %v408
    %455 = vmatprep.subr.mxu0 0.0
    %456 = vmatpush1.msra.mxu0 %v409
    %457 = vmatprep.subr.mxu0 0.0
    %458 = vmatpush1.msra.mxu0 %v410
    %459 = vmatprep.subr.mxu0 0.0
    %460 = vmatpush1.msra.mxu0 %v411
    %461 = vmatprep.subr.mxu0 0.0
    %462 = vmatpush1.msra.mxu0 %v412
    %463 = vmatprep.subr.mxu0 0.0
    %464 = vmatpush1.msra.mxu0 %v413
    %465 = vmatprep.subr.mxu0 0.0
    %466 = vmatpush1.msra.mxu0 %v414
    %467 = vmatprep.subr.mxu0 0.0
    %468 = vmatpush1.msra.mxu0 %v415
    %469 = vmatprep.subr.mxu0 0.0
    %470 = vmatpush1.msra.mxu0 %v416
    %471 = vmatprep.subr.mxu0 0.0
    %472 = vmatpush1.msra.mxu0 %v417
    %473 = vmatprep.subr.mxu0 0.0
    %474 = vmatpush1.msra.mxu0 %v418
    %475 = vmatprep.subr.mxu0 0.0
    %476 = vmatpush1.msra.mxu0 %v419
    %477 = vmatprep.subr.mxu0 0.0
    %478 = vmatpush1.msra.mxu0 %v420
    %479 = vmatprep.subr.mxu0 0.0
    %480 = vmatpush1.msra.mxu0 %v421
    %481 = vmatprep.subr.mxu0 0.0
    %482 = vmatpush1.msra.mxu0 %v422
    %483 = vmatprep.subr.mxu0 0.0
    %484 = vmatpush1.msra.mxu0 %v423
    %485 = vmatprep.subr.mxu0 0.0
    %486 = vmatpush1.msra.mxu0 %v424
    %487 = vmatprep.subr.mxu0 0.0
    %488 = vmatpush1.msra.mxu0 %v425
    %489 = vmatprep.subr.mxu0 0.0
    %490 = vmatpush1.msra.mxu0 %v426
    %491 = vmatprep.subr.mxu0 0.0
    %492 = vmatpush1.msra.mxu0 %v427
    %493 = vmatprep.subr.mxu0 0.0
    %494 = vmatpush1.msra.mxu0 %v428
    %495 = vmatprep.subr.mxu0 0.0
    %496 = vmatpush1.msra.mxu0 %v429
    %497 = vmatprep.subr.mxu0 0.0
    %498 = vmatpush1.msra.mxu0 %v430
    %499 = vmatprep.subr.mxu0 0.0
    %500 = vmatpush1.msra.mxu0 %v431
    %501 = vmatprep.subr.mxu0 0.0
    %502 = vmatpush1.msra.mxu0 %v432
    %503 = vmatprep.subr.mxu0 0.0
    %504 = vmatpush1.msra.mxu0 %v433
    %505 = vmatprep.mubr.f32.mxu0 %v399
    %506 = vmatmul.mubr.f32.gmra.mrb[0].mxu0 %v398
    %v507 = vpop.f32.mrb[0].mxu0
    %v508 = vadd.f32 %v439, %v507
    %v509 = vpop.f32.mrb[0].mxu0
    %510 = vmatprep.mubr.f32.mxu0 %v401
    %511 = vmatmul.mubr.f32.gmra.mrb[0].mxu0 %v400
    %v512 = vpop.f32.mrb[0].mxu0
    %v513 = vadd.f32 %v439, %v512
    %v514 = vpop.f32.mrb[0].mxu0
    %515 = vdwg.mxu0
    %516 = vst [vmem:[#allocation8] sm:$0xff] %v508
    %517 = vst [vmem:[#allocation8 + $0x8] sm:$0xff] %v513
    // Predicated region
    $region46: #{tpu_custom_call.1} parent=1 // pred_check
      _
    $region47: #{tpu_custom_call.1} parent=1 // pred_check_branch
      %519 = sbr.rel (0) target = $region49
    $region48: #{tpu_custom_call.1} parent=1 // pred_region
      %s521 = ssub.s32 256, 256
      %522 = vsyncadd [#allocation4], %s521
      %s523 = sshll.u32 [#allocation8], 4
      %s524 = int_to_ptr.vmem [resolvable:$true] %s523
      %529 = dma.vmem_to_hbm [thread:$0]  %s524, 256, %s8, [#allocation4], 128, 128, 8
    $region49: #{tpu_custom_call.1} parent=1 // pred_fallthru
      _
    // Predicated region
    $region50: #{tpu_custom_call.1} parent=1 // pred_check
      _
    $region51: #{tpu_custom_call.1} parent=1 // pred_check_branch
      %531 = sbr.rel (0) target = $region53
    $region52: #{tpu_custom_call.1} parent=1 // pred_region
      %532 = dma.done [#allocation4], 256
    $region53: #{tpu_custom_call.1} parent=1 // pred_fallthru
      _
    %533 = vsyncpa [#allocation3], 1
    %534 = vsyncpa [#allocation6], 1
    %535 = vsyncpa [#allocation4], 1

</llo_original>
